<compile_context>
chip_gen: v6e
topology: v6e:2x2x1
jax: 0.10.0
libtpu: 0.0.40
codegen_flags: <defaults>
</compile_context>

<pallas_src>
import functools

import jax
import jax.numpy as jnp
from jax.experimental import pallas as pl
from jax.experimental.pallas import tpu as pltpu


def _round_up(v, m):
    return (v + m - 1) // m * m


def _mlp_kernel(x_ref, w1_ref, b1_ref, w2_ref, b2_ref, o_ref):
    # x_ref:  (TM, IN_P)             compute dtype (bf16 by default)
    # w1_ref: (IN_P, HID_P)          b1_ref: (1, HID_P)  f32
    # w2_ref: (HID_P, OUT_P)         b2_ref: (1, OUT_P)  f32
    # o_ref:  (TM, OUT_P)            f32, lane-dense (OUT_P % 128 == 0)
    x = x_ref[...]
    h = jnp.dot(x, w1_ref[...], preferred_element_type=jnp.float32)
    h = jnp.maximum(h + b1_ref[...], 0.0)          # bias + ReLU on the f32 accumulator
    h = h.astype(w2_ref.dtype)                     # back to the MXU input dtype
    out = jnp.dot(h, w2_ref[...], preferred_element_type=jnp.float32)
    o_ref[...] = (out + b2_ref[...]).astype(o_ref.dtype)


@functools.partial(jax.jit, static_argnames=("tile_m", "compute_dtype"))
def object_model_forward(x, w1, b1, w2, b2, *, tile_m=None, compute_dtype=jnp.bfloat16):
    """Forward pass of ObjectModel: relu(x @ w1 + b1) @ w2 + b2.

    x:  [n_objects, input_size] (f32)
    w1: [input_size, hidden_size]   b1: [1, hidden_size] (or [hidden_size])
    w2: [hidden_size, output_size]  b2: [1, output_size] (or [output_size])
    Returns [n_objects, output_size] in f32.
    """
    n_objects, input_size = x.shape
    hidden_size = w1.shape[1]
    output_size = w2.shape[1]
    b1 = b1.reshape(1, hidden_size)
    b2 = b2.reshape(1, output_size)

    # --- M tiling: one big tile at small sizes, 512-row tiles otherwise.
    if tile_m is None:
        tile_m = min(_round_up(n_objects, 8), 512)
    m_pad = _round_up(n_objects, tile_m)

    # --- lane-dense feature padding: hidden/output -> multiples of 128,
    #     input -> multiple of 8 (sublane axis of w1).
    in_pad = _round_up(input_size, 8)
    hid_pad = _round_up(hidden_size, 128)
    out_pad = _round_up(output_size, 128)

    cd = compute_dtype
    xp = jnp.zeros((m_pad, in_pad), cd).at[:n_objects, :input_size].set(x.astype(cd))
    w1p = jnp.zeros((in_pad, hid_pad), cd).at[:input_size, :hidden_size].set(w1.astype(cd))
    w2p = jnp.zeros((hid_pad, out_pad), cd).at[:hidden_size, :output_size].set(w2.astype(cd))
    b1p = jnp.zeros((1, hid_pad), jnp.float32).at[:, :hidden_size].set(b1.astype(jnp.float32))
    b2p = jnp.zeros((1, out_pad), jnp.float32).at[:, :output_size].set(b2.astype(jnp.float32))

    grid = (m_pad // tile_m,)
    resident_vmem = pl.BlockSpec(memory_space=pltpu.MemorySpace.VMEM)

    out = pl.pallas_call(
        _mlp_kernel,
        out_shape=jax.ShapeDtypeStruct((m_pad, out_pad), jnp.float32),
        grid_spec=pltpu.PrefetchScalarGridSpec(
            num_scalar_prefetch=0,
            grid=grid,
            in_specs=[
                # pipelined tiles of objects (full padded feature width)
                pl.BlockSpec((tile_m, in_pad), lambda i: (i, 0)),
                # weights / biases: untiled, held resident in VMEM
                resident_vmem,  # w1
                resident_vmem,  # b1
                resident_vmem,  # w2
                resident_vmem,  # b2
            ],
            out_specs=pl.BlockSpec((tile_m, out_pad), lambda i: (i, 0)),
        ),
        compiler_params=pltpu.CompilerParams(
            dimension_semantics=("parallel",),
        ),
    )(xp, w1p, b1p, w2p, b2p)

    return out[:n_objects, :output_size]


def init_object_model_params(key, input_size, hidden_size, output_size):
    """Deterministic init mimicking PyTorch nn.Linear default U(-1/sqrt(fan_in), 1/sqrt(fan_in))."""
    k1, k2, k3, k4 = jax.random.split(key, 4)
    bound1 = 1.0 / jnp.sqrt(input_size)
    bound2 = 1.0 / jnp.sqrt(hidden_size)
    w1 = jax.random.uniform(k1, (input_size, hidden_size), jnp.float32, -bound1, bound1)
    b1 = jax.random.uniform(k2, (1, hidden_size), jnp.float32, -bound1, bound1)
    w2 = jax.random.uniform(k3, (hidden_size, output_size), jnp.float32, -bound2, bound2)
    b2 = jax.random.uniform(k4, (1, output_size), jnp.float32, -bound2, bound2)
    return w1, b1, w2, b2


if __name__ == "__main__":
    # Small shapes consistent with ObjectModel's forward: x is [n_objects, input_size].
    n_objects, input_size, hidden_size, output_size = 64, 16, 32, 8

    key = jax.random.PRNGKey(0)
    kx, kp = jax.random.split(key)
    x = jax.random.normal(kx, (n_objects, input_size), jnp.float32)
    w1, b1, w2, b2 = init_object_model_params(kp, input_size, hidden_size, output_size)

    out = object_model_forward(x, w1, b1, w2, b2)
    out = jax.block_until_ready(out)
    assert out.shape == (n_objects, output_size)

    # Reference 1: replicate the kernel's bf16-input / f32-accumulate path (tight check).
    cd = jnp.bfloat16
    xr = x.astype(cd).astype(jnp.float32)
    w1r = w1.astype(cd).astype(jnp.float32)
    w2r = w2.astype(cd).astype(jnp.float32)
    h_ref = jnp.maximum(xr @ w1r + b1, 0.0).astype(cd).astype(jnp.float32)
    ref_bf16 = h_ref @ w2r + b2
    assert jnp.allclose(out, ref_bf16, atol=5e-3, rtol=5e-3)

    # Reference 2: pure f32 MLP (loose tolerance covers bf16 input rounding).
    ref_f32 = jnp.maximum(x @ w1 + b1, 0.0) @ w2 + b2
    assert jnp.allclose(out, ref_f32, atol=5e-2, rtol=5e-2)

    print("KERNEL_OK")
</pallas_src>

<mosaic_0001>
module attributes {stable_mosaic.version = 11 : i64} {
  func.func @_mlp_kernel(%arg0: i32, %arg1: memref<64x16xbf16, #tpu.memory_space<vmem>>, %arg2: memref<16x128xbf16, #tpu.memory_space<vmem>>, %arg3: memref<1x128xf32, #tpu.memory_space<vmem>>, %arg4: memref<128x128xbf16, #tpu.memory_space<vmem>>, %arg5: memref<1x128xf32, #tpu.memory_space<vmem>>, %arg6: memref<64x128xf32, #tpu.memory_space<vmem>>) attributes {dimension_semantics = [#tpu.dimension_semantics<parallel>], iteration_bounds = array<i64: 1>, scalar_prefetch = 0 : i64, scratch_operands = 0 : i64, tpu.core_type = #tpu.core_type<tc>, window_params = [{transform_indices = @transform_0, window_bounds = array<i64: 64, 16>}, {pipeline_mode = #tpu.pipeline_mode<synchronous>, transform_indices = @transform_1, window_bounds = array<i64: 16, 128>}, {pipeline_mode = #tpu.pipeline_mode<synchronous>, transform_indices = @transform_2, window_bounds = array<i64: 1, 128>}, {pipeline_mode = #tpu.pipeline_mode<synchronous>, transform_indices = @transform_3, window_bounds = array<i64: 128, 128>}, {pipeline_mode = #tpu.pipeline_mode<synchronous>, transform_indices = @transform_4, window_bounds = array<i64: 1, 128>}, {transform_indices = @transform_5, window_bounds = array<i64: 64, 128>}]} {
    %c0 = arith.constant 0 : index
    %c0_0 = arith.constant 0 : index
    %0 = vector.load %arg1[%c0, %c0_0] : memref<64x16xbf16, #tpu.memory_space<vmem>>, vector<64x16xbf16>
    %c0_1 = arith.constant 0 : index
    %c0_2 = arith.constant 0 : index
    %1 = vector.load %arg2[%c0_1, %c0_2] : memref<16x128xbf16, #tpu.memory_space<vmem>>, vector<16x128xbf16>
    %cst = arith.constant dense<0.000000e+00> : vector<64x128xf32>
    %2 = tpu.matmul %0, %1, %cst {dimension_numbers = #tpu.dot_dimension_numbers<[1], [0], [0], [1], [0, 0, 1, 1], [], []>} : vector<64x16xbf16>, vector<16x128xbf16>, vector<64x128xf32> -> vector<64x128xf32>
    %c0_3 = arith.constant 0 : index
    %c0_4 = arith.constant 0 : index
    %3 = vector.load %arg3[%c0_3, %c0_4] : memref<1x128xf32, #tpu.memory_space<vmem>>, vector<1x128xf32>
    %4 = vector.broadcast %3 : vector<1x128xf32> to vector<64x128xf32>
    %5 = arith.addf %2, %4 : vector<64x128xf32>
    %cst_5 = arith.constant 0.000000e+00 : f32
    %6 = vector.broadcast %cst_5 : f32 to vector<64x128xf32>
    %7 = arith.maximumf %5, %6 : vector<64x128xf32>
    %8 = arith.truncf %7 : vector<64x128xf32> to vector<64x128xbf16>
    %c0_6 = arith.constant 0 : index
    %c0_7 = arith.constant 0 : index
    %9 = vector.load %arg4[%c0_6, %c0_7] : memref<128x128xbf16, #tpu.memory_space<vmem>>, vector<128x128xbf16>
    %cst_8 = arith.constant dense<0.000000e+00> : vector<64x128xf32>
    %10 = tpu.matmul %8, %9, %cst_8 {dimension_numbers = #tpu.dot_dimension_numbers<[1], [0], [0], [1], [0, 0, 1, 1], [], []>} : vector<64x128xbf16>, vector<128x128xbf16>, vector<64x128xf32> -> vector<64x128xf32>
    %c0_9 = arith.constant 0 : index
    %c0_10 = arith.constant 0 : index
    %11 = vector.load %arg5[%c0_9, %c0_10] : memref<1x128xf32, #tpu.memory_space<vmem>>, vector<1x128xf32>
    %12 = vector.broadcast %11 : vector<1x128xf32> to vector<64x128xf32>
    %13 = arith.addf %10, %12 : vector<64x128xf32>
    %c0_11 = arith.constant 0 : index
    %c0_12 = arith.constant 0 : index
    %14 = vector.load %arg6[%c0_11, %c0_12] : memref<64x128xf32, #tpu.memory_space<vmem>>, vector<64x128xf32>
    tpu.vector_store %arg6[%c0_11, %c0_12], %13 {strides = array<i32>} : memref<64x128xf32, #tpu.memory_space<vmem>>, vector<64x128xf32>,
    return
  }
  func.func @transform_0(%arg0: i32) -> (i32, i32) {
    %c0_i32 = arith.constant 0 : i32
    %c0_i32_0 = arith.constant 0 : i32
    return %arg0, %c0_i32 : i32, i32
  }
  func.func @transform_1(%arg0: i32) -> (i32, i32) {
    %c0_i32 = arith.constant 0 : i32
    %c0_i32_0 = arith.constant 0 : i32
    %c0_i32_1 = arith.constant 0 : i32
    return %c0_i32, %c0_i32_0 : i32, i32
  }
  func.func @transform_2(%arg0: i32) -> (i32, i32) {
    %c0_i32 = arith.constant 0 : i32
    %c0_i32_0 = arith.constant 0 : i32
    %c0_i32_1 = arith.constant 0 : i32
    return %c0_i32, %c0_i32_0 : i32, i32
  }
  func.func @transform_3(%arg0: i32) -> (i32, i32) {
    %c0_i32 = arith.constant 0 : i32
    %c0_i32_0 = arith.constant 0 : i32
    %c0_i32_1 = arith.constant 0 : i32
    return %c0_i32, %c0_i32_0 : i32, i32
  }
  func.func @transform_4(%arg0: i32) -> (i32, i32) {
    %c0_i32 = arith.constant 0 : i32
    %c0_i32_0 = arith.constant 0 : i32
    %c0_i32_1 = arith.constant 0 : i32
    return %c0_i32, %c0_i32_0 : i32, i32
  }
  func.func @transform_5(%arg0: i32) -> (i32, i32) {
    %c0_i32 = arith.constant 0 : i32
    %c0_i32_0 = arith.constant 0 : i32
    return %arg0, %c0_i32 : i32, i32
  }
}

</mosaic_0001>

<llo_original>
// kernel: object_model_forward.1
$region0: #{object_model_forward.1}
  #allocation0 [shape = 'u32[]', space=smem, size = 0x4, offset = 0x4, fixed_abs, tag = 'smem constant byte address 0x4 - core index']
  #allocation1 [shape = 'u32[144,128]{1,0:T(1,128)}', space=vmem, size = 0x12000, scoped, tag = 'internal scratch']
  %s0 = inlined_call_operand.vmem [shape: bf16[64,16], index: 0, kind: input, shape index: {}]
  %s1 = inlined_call_operand.vmem [shape: bf16[16,128], index: 1, kind: input, shape index: {}]
  %s2 = inlined_call_operand.vmem [shape: f32[1,128], index: 2, kind: input, shape index: {}]
  %s3 = inlined_call_operand.vmem [shape: bf16[128,128], index: 3, kind: input, shape index: {}]
  %s4 = inlined_call_operand.vmem [shape: f32[1,128], index: 4, kind: input, shape index: {}]
  %s5 = inlined_call_operand.vmem [shape: f32[64,128], index: 5, kind: output, shape index: {}]
  %s6 = sld [smem:[#allocation0]]
  $region30: #{object_model_forward.1} parent=0
    _
  %s8 = ssub.s32 1, %s6
  %s9 = scalar_select 0, %s8, %s6
  // Predicated region
  $region2: #{object_model_forward.1} parent=0 // pred_check
    _
  $region3: #{object_model_forward.1} parent=0 // pred_check_branch
    %11 = sbr.rel (0) target = $region5
  $region4: #{object_model_forward.1} parent=0 // pred_region
    _
  $region5: #{object_model_forward.1} parent=0 // pred_fallthru
    _
  // Predicated region
  $region6: #{object_model_forward.1} parent=0 // pred_check
    _
  $region7: #{object_model_forward.1} parent=0 // pred_check_branch
    %13 = sbr.rel (0) target = $region9
  $region8: #{object_model_forward.1} parent=0 // pred_region
    _
  $region9: #{object_model_forward.1} parent=0 // pred_fallthru
    _
  // Predicated region
  $region10: #{object_model_forward.1} parent=0 // pred_check
    _
  $region11: #{object_model_forward.1} parent=0 // pred_check_branch
    %15 = sbr.rel (0) target = $region13
  $region12: #{object_model_forward.1} parent=0 // pred_region
    _
  $region13: #{object_model_forward.1} parent=0 // pred_fallthru
    _
  // Predicated region
  $region14: #{object_model_forward.1} parent=0 // pred_check
    _
  $region15: #{object_model_forward.1} parent=0 // pred_check_branch
    %17 = sbr.rel (0) target = $region17
  $region16: #{object_model_forward.1} parent=0 // pred_region
    _
  $region17: #{object_model_forward.1} parent=0 // pred_fallthru
    _
  // Predicated region
  $region18: #{object_model_forward.1} parent=0 // pred_check
    _
  $region19: #{object_model_forward.1} parent=0 // pred_check_branch
    %19 = sbr.rel (0) target = $region21
  $region20: #{object_model_forward.1} parent=0 // pred_region
    _
  $region21: #{object_model_forward.1} parent=0 // pred_fallthru
    _
  %v21 = vld [vmem:[%s0] sm:$0xf]
  %v22 = vld [vmem:[%s0 + $0x4] sm:$0xf]
  %v23 = vld [vmem:[%s0 + $0x8] sm:$0xf]
  %v24 = vld [vmem:[%s0 + $0xc] sm:$0xf]
  %v25 = vld [vmem:[%s0 + $0x10] sm:$0xf]
  %v26 = vld [vmem:[%s0 + $0x14] sm:$0xf]
  %v27 = vld [vmem:[%s0 + $0x18] sm:$0xf]
  %v28 = vld [vmem:[%s0 + $0x1c] sm:$0xf]
  %v29 = vld [vmem:[%s1] sm:$0xf]
  %v30 = vld [vmem:[%s1 + $0x4] sm:$0xf]
  %v31 = vld [vmem:[%s2] sm:$0x1]
  %v33 = vlaneseq
  %v34 = vshrl.u32 %v33, 7
  %v35 = vsub.s32 0, %v34
  %v36 = vrot.slane %v31, %v35
  %v46 = vunpack.c.l.b16 %v21
  %v47 = vunpack.c.l.b16 %v22
  %v48 = vunpack.c.l.b16 %v23
  %v49 = vunpack.c.l.b16 %v24
  %v50 = vunpack.c.l.b16 %v25
  %v51 = vunpack.c.l.b16 %v26
  %v52 = vunpack.c.l.b16 %v27
  %v53 = vunpack.c.l.b16 %v28
  %v54 = vpack.c.b16 %v47, %v46
  %v55 = vpack.c.b16 %v49, %v48
  %v56 = vpack.c.b16 %v51, %v50
  %v57 = vpack.c.b16 %v53, %v52
  %v60 = vunpack.c.l.b16 %v29
  %v61 = vunpack.c.l.b16 %v30
  %v62 = vpack.c.b16 %v61, %v60
  %vm64 = vcmask 130048
  %v66 = vsel %vm64, %v54, 0
  %v69 = vsel %vm64, %v55, 0
  %v72 = vsel %vm64, %v56, 0
  %v75 = vsel %vm64, %v57, 0
  %77 = vmatprep.subr.bf16.mxu0 0
  %78 = vmatpush1.bf16.msra.mxu0 0
  %79 = vmatprep.subr.bf16.mxu0 0
  %80 = vmatpush1.bf16.msra.mxu0 0
  %81 = vmatprep.subr.bf16.mxu0 0
  %82 = vmatpush1.bf16.msra.mxu0 0
  %83 = vmatprep.subr.bf16.mxu0 0
  %84 = vmatpush1.bf16.msra.mxu0 0
  %85 = vmatprep.subr.bf16.mxu0 0
  %86 = vmatpush1.bf16.msra.mxu0 0
  %87 = vmatprep.subr.bf16.mxu0 0
  %88 = vmatpush1.bf16.msra.mxu0 0
  %89 = vmatprep.subr.bf16.mxu0 0
  %90 = vmatpush1.bf16.msra.mxu0 0
  %91 = vmatprep.subr.bf16.mxu0 0
  %92 = vmatpush1.bf16.msra.mxu0 %v62
  %93 = vmatprep.subr.bf16.mxu0 0
  %94 = vmatpush2.bf16.msra.mxu0 0
  %95 = vmatprep.subr.bf16.mxu0 0
  %96 = vmatpush2.bf16.msra.mxu0 0
  %97 = vmatprep.subr.bf16.mxu0 0
  %98 = vmatpush2.bf16.msra.mxu0 0
  %99 = vmatprep.subr.bf16.mxu0 0
  %100 = vmatpush2.bf16.msra.mxu0 0
  %101 = vmatprep.subr.bf16.mxu0 0
  %102 = vmatpush2.bf16.msra.mxu0 0
  %103 = vmatprep.subr.bf16.mxu0 0
  %104 = vmatpush2.bf16.msra.mxu0 0
  %105 = vmatprep.subr.bf16.mxu0 0
  %106 = vmatpush2.bf16.msra.mxu0 0
  %107 = vmatprep.subr.bf16.mxu0 0
  %108 = vmatpush2.bf16.msra.mxu0 0
  %109 = vmatprep.mubr.bf16.mxu0 0
  %110 = vmatmul.mubr.bf16.gmra.mxu0 %v66
  %v111 = vpop.f32.mrf.mxu0
  %v112 = vadd.f32 %v36, %v111
  %v113 = vpop.f32.mrf.mxu0
  %v114 = vpop.f32.mrf.mxu0
  %v115 = vadd.f32 %v36, %v114
  %v116 = vpop.f32.mrf.mxu0
  %117 = vmatprep.mubr.bf16.mxu0 0
  %118 = vmatmul.mubr.bf16.gmra.mxu0 %v69
  %v119 = vpop.f32.mrf.mxu0
  %v120 = vadd.f32 %v36, %v119
  %v121 = vpop.f32.mrf.mxu0
  %v122 = vpop.f32.mrf.mxu0
  %v123 = vadd.f32 %v36, %v122
  %v124 = vpop.f32.mrf.mxu0
  %125 = vmatprep.mubr.bf16.mxu0 0
  %126 = vmatmul.mubr.bf16.gmra.mxu0 %v72
  %v127 = vpop.f32.mrf.mxu0
  %v128 = vadd.f32 %v36, %v127
  %v129 = vpop.f32.mrf.mxu0
  %v130 = vpop.f32.mrf.mxu0
  %v131 = vadd.f32 %v36, %v130
  %v132 = vpop.f32.mrf.mxu0
  %133 = vmatprep.mubr.bf16.mxu0 0
  %134 = vmatmul.mubr.bf16.gmra.mxu0 %v75
  %v135 = vpop.f32.mrf.mxu0
  %v136 = vadd.f32 %v36, %v135
  %v137 = vpop.f32.mrf.mxu0
  %v138 = vpop.f32.mrf.mxu0
  %v139 = vadd.f32 %v36, %v138
  %v140 = vpop.f32.mrf.mxu0
  %141 = vdwg.mxu0
  %v142 = vmax.f32 %v112, 0.0
  %v143 = vmax.f32 %v115, 0.0
  %v144 = vmax.f32 %v120, 0.0
  %v145 = vmax.f32 %v123, 0.0
  %v146 = vmax.f32 %v128, 0.0
  %v147 = vmax.f32 %v131, 0.0
  %v148 = vmax.f32 %v136, 0.0
  %v149 = vmax.f32 %v139, 0.0
  %v150 = vpack.c.bf16 %v143, %v142
  %v151 = vpack.c.bf16 %v145, %v144
  %v152 = vpack.c.bf16 %v147, %v146
  %v153 = vpack.c.bf16 %v149, %v148
  %v154 = vld [vmem:[%s3] sm:$0xf]
  %v155 = vld [vmem:[%s3 + $0x4] sm:$0xf]
  %v156 = vld [vmem:[%s3 + $0x8] sm:$0xf]
  %v157 = vld [vmem:[%s3 + $0xc] sm:$0xf]
  %v158 = vld [vmem:[%s3 + $0x10] sm:$0xf]
  %v159 = vld [vmem:[%s3 + $0x14] sm:$0xf]
  %v160 = vld [vmem:[%s3 + $0x18] sm:$0xf]
  %v161 = vld [vmem:[%s3 + $0x1c] sm:$0xf]
  %v162 = vld [vmem:[%s3 + $0x20] sm:$0xf]
  %v163 = vld [vmem:[%s3 + $0x24] sm:$0xf]
  %v164 = vld [vmem:[%s3 + $0x28] sm:$0xf]
  %v165 = vld [vmem:[%s3 + $0x2c] sm:$0xf]
  %v166 = vld [vmem:[%s3 + $0x30] sm:$0xf]
  %v167 = vld [vmem:[%s3 + $0x34] sm:$0xf]
  %v168 = vld [vmem:[%s3 + $0x38] sm:$0xf]
  %v169 = vld [vmem:[%s3 + $0x3c] sm:$0xf]
  %v170 = vld [vmem:[%s4] sm:$0x1]
  %v172 = vlaneseq
  %v173 = vshrl.u32 %v172, 7
  %v174 = vsub.s32 0, %v173
  %v175 = vrot.slane %v170, %v174
  %v193 = vunpack.c.l.b16 %v154
  %v194 = vunpack.c.l.b16 %v155
  %v195 = vunpack.c.l.b16 %v156
  %v196 = vunpack.c.l.b16 %v157
  %v197 = vunpack.c.l.b16 %v158
  %v198 = vunpack.c.l.b16 %v159
  %v199 = vunpack.c.l.b16 %v160
  %v200 = vunpack.c.l.b16 %v161
  %v201 = vunpack.c.l.b16 %v162
  %v202 = vunpack.c.l.b16 %v163
  %v203 = vunpack.c.l.b16 %v164
  %v204 = vunpack.c.l.b16 %v165
  %v205 = vunpack.c.l.b16 %v166
  %v206 = vunpack.c.l.b16 %v167
  %v207 = vunpack.c.l.b16 %v168
  %v208 = vunpack.c.l.b16 %v169
  %v209 = vpack.c.b16 %v194, %v193
  %v210 = vpack.c.b16 %v196, %v195
  %v211 = vpack.c.b16 %v198, %v197
  %v212 = vpack.c.b16 %v200, %v199
  %v213 = vpack.c.b16 %v202, %v201
  %v214 = vpack.c.b16 %v204, %v203
  %v215 = vpack.c.b16 %v206, %v205
  %v216 = vpack.c.b16 %v208, %v207
  %225 = vmatprep.subr.bf16.mxu0 0
  %226 = vmatpush1.bf16.msra.mxu0 %v216
  %227 = vmatprep.subr.bf16.mxu0 0
  %228 = vmatpush1.bf16.msra.mxu0 %v215
  %229 = vmatprep.subr.bf16.mxu0 0
  %230 = vmatpush1.bf16.msra.mxu0 %v214
  %231 = vmatprep.subr.bf16.mxu0 0
  %232 = vmatpush1.bf16.msra.mxu0 %v213
  %233 = vmatprep.subr.bf16.mxu0 0
  %234 = vmatpush1.bf16.msra.mxu0 %v212
  %235 = vmatprep.subr.bf16.mxu0 0
  %236 = vmatpush1.bf16.msra.mxu0 %v211
  %237 = vmatprep.subr.bf16.mxu0 0
  %238 = vmatpush1.bf16.msra.mxu0 %v210
  %239 = vmatprep.subr.bf16.mxu0 0
  %240 = vmatpush1.bf16.msra.mxu0 %v209
  %241 = vmatprep.subr.bf16.mxu0 0
  %242 = vmatpush2.bf16.msra.mxu0 0
  %243 = vmatprep.subr.bf16.mxu0 0
  %244 = vmatpush2.bf16.msra.mxu0 0
  %245 = vmatprep.subr.bf16.mxu0 0
  %246 = vmatpush2.bf16.msra.mxu0 0
  %247 = vmatprep.subr.bf16.mxu0 0
  %248 = vmatpush2.bf16.msra.mxu0 0
  %249 = vmatprep.subr.bf16.mxu0 0
  %250 = vmatpush2.bf16.msra.mxu0 0
  %251 = vmatprep.subr.bf16.mxu0 0
  %252 = vmatpush2.bf16.msra.mxu0 0
  %253 = vmatprep.subr.bf16.mxu0 0
  %254 = vmatpush2.bf16.msra.mxu0 0
  %255 = vmatprep.subr.bf16.mxu0 0
  %256 = vmatpush2.bf16.msra.mxu0 0
  %257 = vmatprep.mubr.bf16.mxu0 0
  %258 = vmatmul.mubr.bf16.gmra.mxu0 %v150
  %v259 = vpop.f32.mrf.mxu0
  %v260 = vadd.f32 %v175, %v259
  %v261 = vpop.f32.mrf.mxu0
  %v262 = vpop.f32.mrf.mxu0
  %v263 = vadd.f32 %v175, %v262
  %v264 = vpop.f32.mrf.mxu0
  %265 = vmatprep.mubr.bf16.mxu0 0
  %266 = vmatmul.mubr.bf16.gmra.mxu0 %v151
  %v267 = vpop.f32.mrf.mxu0
  %v268 = vadd.f32 %v175, %v267
  %v269 = vpop.f32.mrf.mxu0
  %v270 = vpop.f32.mrf.mxu0
  %v271 = vadd.f32 %v175, %v270
  %v272 = vpop.f32.mrf.mxu0
  %273 = vmatprep.mubr.bf16.mxu0 0
  %274 = vmatmul.mubr.bf16.gmra.mxu0 %v152
  %v275 = vpop.f32.mrf.mxu0
  %v276 = vadd.f32 %v175, %v275
  %v277 = vpop.f32.mrf.mxu0
  %v278 = vpop.f32.mrf.mxu0
  %v279 = vadd.f32 %v175, %v278
  %v280 = vpop.f32.mrf.mxu0
  %281 = vmatprep.mubr.bf16.mxu0 0
  %282 = vmatmul.mubr.bf16.gmra.mxu0 %v153
  %v283 = vpop.f32.mrf.mxu0
  %v284 = vadd.f32 %v175, %v283
  %v285 = vpop.f32.mrf.mxu0
  %v286 = vpop.f32.mrf.mxu0
  %v287 = vadd.f32 %v175, %v286
  %v288 = vpop.f32.mrf.mxu0
  %289 = vdwg.mxu0
  %290 = vst [vmem:[%s5] sm:$0xff] %v260
  %291 = vst [vmem:[%s5 + $0x8] sm:$0xff] %v263
  %292 = vst [vmem:[%s5 + $0x10] sm:$0xff] %v268
  %293 = vst [vmem:[%s5 + $0x18] sm:$0xff] %v271
  %294 = vst [vmem:[%s5 + $0x20] sm:$0xff] %v276
  %295 = vst [vmem:[%s5 + $0x28] sm:$0xff] %v279
  %296 = vst [vmem:[%s5 + $0x30] sm:$0xff] %v284
  %297 = vst [vmem:[%s5 + $0x38] sm:$0xff] %v287
  // Predicated region
  $region22: #{object_model_forward.1} parent=0 // pred_check
    _
  $region23: #{object_model_forward.1} parent=0 // pred_check_branch
    %299 = sbr.rel (0) target = $region25
  $region24: #{object_model_forward.1} parent=0 // pred_region
    _
  $region25: #{object_model_forward.1} parent=0 // pred_fallthru
    _
  // Predicated region
  $region26: #{object_model_forward.1} parent=0 // pred_check
    _
  $region27: #{object_model_forward.1} parent=0 // pred_check_branch
    %301 = sbr.rel (0) target = $region29
  $region28: #{object_model_forward.1} parent=0 // pred_region
    _
  $region29: #{object_model_forward.1} parent=0 // pred_fallthru
    _

</llo_original>
